<compile_context>
chip_gen: v7x
topology: tpu7x:2x2x1
jax: 0.10.0
libtpu: 0.0.40
codegen_flags: <defaults>
</compile_context>

<pallas_src>
import functools
import math

import jax
import jax.numpy as jnp
from jax.experimental import pallas as pl
from jax.experimental.pallas import tpu as pltpu

# TODO(synk): pretrained ResNet50 / DistilBERT checkpoints cannot be loaded here; weights
#             are synthetic and hidden dims are reduced (the forward-pass structure matches).


def _round_up(x, m):
    return ((x + m - 1) // m) * m


@functools.lru_cache(maxsize=1)
def _hw_tile_caps():
    """Generation-aware caps: (tm, tn, tk, vmem_limit_bytes, ln_row_tile)."""
    try:
        vmem = int(pltpu.get_tpu_info().vmem_capacity_bytes)
    except Exception:
        vmem = 64 << 20
    if vmem >= (100 << 20):                 # v5e / v6e: 128 MiB VMEM -> deep tiles
        return 512, 512, 512, 64 << 20, 1024
    return 512, 512, 256, 48 << 20, 512     # v7x: 64 MiB physical VMEM


# -------------------------------------------------- pre-padded / pre-cast dense params
def make_dense(w, b):
    """Pad weight/bias to 128-multiples and cast weight to bf16 ONCE at init."""
    K, N = w.shape
    Kp, Np = _round_up(K, 128), _round_up(N, 128)
    wp = jnp.pad(w.astype(jnp.float32), ((0, Kp - K), (0, Np - N))).astype(jnp.bfloat16)
    bp = jnp.pad(b.reshape(1, N).astype(jnp.float32), ((0, 0), (0, Np - N)))
    return {"w": wp, "b": bp, "k": K, "n": N}


# ------------------------------------------------------- fused tiled matmul (MXU) kernel
def _mm_kernel(*refs, act, has_residual, l2norm):
    it = iter(refs)
    x_ref = next(it)
    w_ref = next(it)
    b_ref = next(it)
    r_ref = next(it) if has_residual else None
    o_ref = next(it)
    acc_ref = next(it)

    @pl.when(pl.program_id(2) == 0)
    def _():
        acc_ref[...] = jnp.zeros(acc_ref.shape, acc_ref.dtype)

    acc_ref[...] += jnp.dot(x_ref[...], w_ref[...], preferred_element_type=jnp.float32)

    @pl.when(pl.program_id(2) == pl.num_programs(2) - 1)
    def _():
        acc = acc_ref[...] + b_ref[...]
        if has_residual:
            acc = acc + r_ref[...].astype(jnp.float32)
        if act == "relu":
            acc = jnp.maximum(acc, 0.0)
        elif act == "gelu":
            # TODO(synk): DistilBERT uses exact erf-GELU; tanh approximation used here.
            c = 0.7978845608028654
            acc = 0.5 * acc * (1.0 + jnp.tanh(c * (acc + 0.044715 * acc * acc * acc)))
        if l2norm:
            nrm = jnp.sqrt(jnp.sum(acc * acc, axis=-1, keepdims=True))
            acc = acc / jnp.maximum(nrm, 1e-12)     # F.normalize(p=2, dim=-1)
        o_ref[...] = acc.astype(o_ref.dtype)


def matmul_fused(x, dense, *, residual=None, act="none", l2norm=False,
                 out_dtype=jnp.bfloat16):
    """y = act(x @ W + b [+ residual]) [l2-normalized]; W/b are pre-padded bf16/f32."""
    M, Kx = x.shape
    w, b = dense["w"], dense["b"]
    Kp, Np = w.shape
    K, N = dense["k"], dense["n"]
    assert Kx == K or Kx == Kp
    tm_cap, tn_cap, tk_cap, vmem_limit, _ = _hw_tile_caps()

    tm = min(tm_cap, _round_up(M, 8))
    Mp = _round_up(M, tm)
    tn = min(tn_cap, Np)
    while Np % tn:
        tn -= 128
    tk = min(tk_cap, Kp)
    while Kp % tk:
        tk -= 128
    if l2norm:
        assert Np == tn, "l2norm epilogue needs the full output row in one N tile"

    xb = x if x.dtype == jnp.bfloat16 else x.astype(jnp.bfloat16)
    if xb.shape != (Mp, Kp):
        xb = jnp.pad(xb, ((0, Mp - M), (0, Kp - Kx)))

    operands = [xb, w, b]
    in_specs = [pl.BlockSpec((tm, tk), lambda i, j, k: (i, k)),
                pl.BlockSpec((tk, tn), lambda i, j, k: (k, j)),
                pl.BlockSpec((1, tn), lambda i, j, k: (0, j))]
    if residual is not None:
        rb = residual if residual.dtype == jnp.bfloat16 else residual.astype(jnp.bfloat16)
        if rb.shape != (Mp, Np):
            rb = jnp.pad(rb, ((0, Mp - rb.shape[0]), (0, Np - rb.shape[1])))
        operands.append(rb)
        in_specs.append(pl.BlockSpec((tm, tn), lambda i, j, k: (i, j)))

    out = pl.pallas_call(
        functools.partial(_mm_kernel, act=act, has_residual=residual is not None,
                          l2norm=l2norm),
        grid=(Mp // tm, Np // tn, Kp // tk),
        in_specs=in_specs,
        out_specs=pl.BlockSpec((tm, tn), lambda i, j, k: (i, j)),
        out_shape=jax.ShapeDtypeStruct((Mp, Np), out_dtype),
        scratch_shapes=[pltpu.VMEM((tm, tn), jnp.float32)],
        compiler_params=pltpu.CompilerParams(
            dimension_semantics=("parallel", "parallel", "arbitrary"),
            vmem_limit_bytes=vmem_limit),
    )(*operands)
    if (Mp, Np) != (M, N):
        out = out[:M, :N]
    return out


# -------------------------------------------------------------------- LayerNorm (+res)
def _ln_kernel(*refs, eps, has_residual):
    it = iter(refs)
    x_ref = next(it)
    r_ref = next(it) if has_residual else None
    g_ref = next(it)
    b_ref = next(it)
    o_ref = next(it)
    x = x_ref[...].astype(jnp.float32)
    if has_residual:
        x = x + r_ref[...].astype(jnp.float32)
    mu = jnp.mean(x, axis=-1, keepdims=True)
    xc = x - mu
    var = jnp.mean(xc * xc, axis=-1, keepdims=True)
    y = xc * jax.lax.rsqrt(var + eps) * g_ref[...] + b_ref[...]
    o_ref[...] = y.astype(o_ref.dtype)


def layernorm(x, gamma, beta, residual=None, eps=1e-12, out_dtype=jnp.bfloat16):
    M, H = x.shape
    ln_cap = _hw_tile_caps()[4]
    tm = min(ln_cap, _round_up(M, 8))
    Mp = _round_up(M, tm)

    def maybe_pad(a):
        return a if Mp == M else jnp.pad(a, ((0, Mp - M), (0, 0)))

    operands = [maybe_pad(x)]
    in_specs = [pl.BlockSpec((tm, H), lambda i: (i, 0))]
    if residual is not None:
        operands.append(maybe_pad(residual))
        in_specs.append(pl.BlockSpec((tm, H), lambda i: (i, 0)))
    operands += [gamma.reshape(1, H).astype(jnp.float32),
                 beta.reshape(1, H).astype(jnp.float32)]
    in_specs += [pl.BlockSpec((1, H), lambda i: (0, 0)),
                 pl.BlockSpec((1, H), lambda i: (0, 0))]

    out = pl.pallas_call(
        functools.partial(_ln_kernel, eps=eps, has_residual=residual is not None),
        grid=(Mp // tm,),
        in_specs=in_specs,
        out_specs=pl.BlockSpec((tm, H), lambda i: (i, 0)),
        out_shape=jax.ShapeDtypeStruct((Mp, H), out_dtype),
        compiler_params=pltpu.CompilerParams(dimension_semantics=("parallel",)),
    )(*operands)
    return out if Mp == M else out[:M]


# ------------------------------------------------------- head-fused flash attention
def _flash_attn_kernel(q_ref, k_ref, v_ref, m_ref, o_ref, m_sc, l_sc, acc_sc,
                       *, hc, dh, q_off, k_off, v_off):
    ki = pl.program_id(3)

    @pl.when(ki == 0)
    def _():
        m_sc[...] = jnp.full(m_sc.shape, -jnp.inf, m_sc.dtype)
        l_sc[...] = jnp.zeros(l_sc.shape, l_sc.dtype)
        acc_sc[...] = jnp.zeros(acc_sc.shape, acc_sc.dtype)

    q = q_ref[0]                      # (t, blk) bf16
    k = k_ref[0]
    v = v_ref[0]
    madd = m_ref[0]                   # (1, t) additive key mask, broadcast over q rows

    for h in range(hc):               # static unroll over heads in this chunk
        lo = h * dh
        qh = q[:, q_off + lo:q_off + lo + dh]
        kh = k[:, k_off + lo:k_off + lo + dh]
        vh = v[:, v_off + lo:v_off + lo + dh]
        # 1/sqrt(Dh) is folded into the Q weights at init -> no per-tile scale here.
        s = jax.lax.dot_general(qh, kh, (((1,), (1,)), ((), ())),
                                preferred_element_type=jnp.float32)      # (t, t)
        s = s + madd
        m_prev = m_sc[:, h:h + 1]
        m_new = jnp.maximum(m_prev, jnp.max(s, axis=-1, keepdims=True))
        alpha = jnp.exp(m_prev - m_new)
        p = jnp.exp(s - m_new)
        l_sc[:, h:h + 1] = alpha * l_sc[:, h:h + 1] + jnp.sum(p, axis=-1, keepdims=True)
        acc_sc[:, lo:lo + dh] = alpha * acc_sc[:, lo:lo + dh] + jnp.dot(
            p.astype(v.dtype), vh, preferred_element_type=jnp.float32)
        m_sc[:, h:h + 1] = m_new

    @pl.when(ki == pl.num_programs(3) - 1)
    def _():
        for h in range(hc):
            lo = h * dh
            inv = pl.reciprocal(l_sc[:, h:h + 1], approx=True)
            acc_sc[:, lo:lo + dh] = acc_sc[:, lo:lo + dh] * inv
        o_ref[0] = acc_sc[...].astype(o_ref.dtype)   # single full-width (lane-dense) store


def flash_attention(qkv, mask_add, n_heads, H):
    """qkv: (B, L, 3H) bf16 (fused Q|K|V); mask_add: (B, L) additive key mask.
    Returns the merged context as (B*L, H) bf16 — no XLA head split/merge transposes."""
    B, L, threeH = qkv.shape
    assert threeH == 3 * H
    Dh = H // n_heads
    hc = max(1, min(n_heads, 128 // max(Dh, 1)))
    while n_heads % hc:
        hc -= 1
    cw = hc * Dh

    Lp = _round_up(L, 8) if L <= 128 else _round_up(L, 128)
    t = min(Lp, 128)
    if Lp != L:
        qkv = jnp.pad(qkv, ((0, 0), (0, Lp - L), (0, 0)))
        mask_add = jnp.pad(mask_add, ((0, 0), (0, Lp - L)), constant_values=-1e9)
    m3 = mask_add.reshape(B, 1, Lp).astype(jnp.float32)

    if cw % 128 == 0:
        # efficient path (real sizes, e.g. Dh=64 -> 2 heads/program, 128-lane blocks)
        n_chunks = n_heads // hc
        blk = cw
        q_off = k_off = v_off = 0
        q_spec = pl.BlockSpec((1, t, blk), lambda b, c, qi, ki: (b, qi, c))
        k_spec = pl.BlockSpec((1, t, blk), lambda b, c, qi, ki: (b, ki, n_chunks + c))
        v_spec = pl.BlockSpec((1, t, blk), lambda b, c, qi, ki: (b, ki, 2 * n_chunks + c))
        out_spec = pl.BlockSpec((1, t, blk), lambda b, c, qi, ki: (b, qi, c))
    else:
        # small-model fallback: load the full (legal, full-dim) 3H row block per program
        hc, cw, n_chunks = n_heads, H, 1
        blk = 3 * H
        q_off, k_off, v_off = 0, H, 2 * H
        q_spec = pl.BlockSpec((1, t, blk), lambda b, c, qi, ki: (b, qi, 0))
        k_spec = pl.BlockSpec((1, t, blk), lambda b, c, qi, ki: (b, ki, 0))
        v_spec = k_spec
        out_spec = pl.BlockSpec((1, t, H), lambda b, c, qi, ki: (b, qi, 0))

    out = pl.pallas_call(
        functools.partial(_flash_attn_kernel, hc=hc, dh=Dh,
                          q_off=q_off, k_off=k_off, v_off=v_off),
        grid=(B, n_chunks, Lp // t, Lp // t),
        in_specs=[q_spec, k_spec, v_spec,
                  pl.BlockSpec((1, 1, t), lambda b, c, qi, ki: (b, 0, ki))],
        out_specs=out_spec,
        out_shape=jax.ShapeDtypeStruct((B, Lp, H), jnp.bfloat16),
        scratch_shapes=[pltpu.VMEM((t, hc), jnp.float32),
                        pltpu.VMEM((t, hc), jnp.float32),
                        pltpu.VMEM((t, cw), jnp.float32)],
        compiler_params=pltpu.CompilerParams(
            dimension_semantics=("parallel", "parallel", "parallel", "arbitrary")),
    )(qkv, qkv, qkv, m3)
    if Lp != L:
        out = out[:, :L, :]
    return out.reshape(B * L, H)


# ----------------------------------------------------------------- global average pool
def _gap_kernel(x_ref, o_ref):
    o_ref[...] = jnp.mean(x_ref[...].astype(jnp.float32), axis=1).astype(o_ref.dtype)


def global_avg_pool(x_nhwc):
    N, H, W, C = x_nhwc.shape
    x = x_nhwc.reshape(N, H * W, C)
    if C % 128 == 0:
        tc = min(C, 512)
        while C % tc:
            tc -= 128
    else:
        tc = C
    return pl.pallas_call(
        _gap_kernel,
        grid=(C // tc,),
        in_specs=[pl.BlockSpec((N, H * W, tc), lambda j: (0, 0, j))],
        out_specs=pl.BlockSpec((N, tc), lambda j: (0, j)),
        out_shape=jax.ShapeDtypeStruct((N, C), jnp.bfloat16),
        compiler_params=pltpu.CompilerParams(dimension_semantics=("parallel",)),
    )(x)


# ------------------------------------------------------------------- conv glue (im2col)
def im2col(x, kh, kw, stride, pad):
    """x: NHWC -> (N, Ho, Wo, kh*kw*C) patches, channel-minor within each (i,j) tap."""
    N, H, W, C = x.shape
    xp = jnp.pad(x, ((0, 0), (pad, pad), (pad, pad), (0, 0)))
    Ho = (H + 2 * pad - kh) // stride + 1
    Wo = (W + 2 * pad - kw) // stride + 1
    cols = []
    for i in range(kh):
        for j in range(kw):
            cols.append(xp[:, i:i + (Ho - 1) * stride + 1:stride,
                           j:j + (Wo - 1) * stride + 1:stride, :])
    return jnp.concatenate(cols, axis=-1), Ho, Wo


def conv_bn(x, p, stride, pad, act, residual=None):
    """Conv (no bias) + folded BatchNorm(eval) + optional residual + act, fused in matmul."""
    N = x.shape[0]
    if p["kh"] == 1 and p["kw"] == 1:
        if stride > 1:
            x = x[:, ::stride, ::stride, :]          # 1x1 conv: no patch duplication
        Ho, Wo = x.shape[1], x.shape[2]
        cols = x
    else:
        # TODO(synk): 3x3/7x7 convs still use XLA im2col; a direct tap-accumulating Pallas
        #             conv (manual-DMA shifted windows) would remove the patch duplication.
        cols, Ho, Wo = im2col(x, p["kh"], p["kw"], stride, pad)
    M = N * Ho * Wo
    r = residual.reshape(M, -1) if residual is not None else None
    y = matmul_fused(cols.reshape(M, -1), p["dense"], residual=r, act=act)
    return y.reshape(N, Ho, Wo, -1)


def maxpool_3x3_s2(x):
    N, H, W, C = x.shape
    pad = 1
    xp = jnp.pad(x, ((0, 0), (pad, pad), (pad, pad), (0, 0)), constant_values=-jnp.inf)
    Ho = (H + 2 * pad - 3) // 2 + 1
    Wo = (W + 2 * pad - 3) // 2 + 1
    out = jnp.full((N, Ho, Wo, C), -jnp.inf, x.dtype)
    for i in range(3):
        for j in range(3):
            out = jnp.maximum(
                out, xp[:, i:i + (Ho - 1) * 2 + 1:2, j:j + (Wo - 1) * 2 + 1:2, :])
    return out


def bottleneck(x, bp):
    if "down" in bp:
        identity = conv_bn(x, bp["down"], stride=bp["stride"], pad=0, act="none")
    else:
        identity = x
    out = conv_bn(x, bp["c1"], stride=1, pad=0, act="relu")
    out = conv_bn(out, bp["c2"], stride=bp["stride"], pad=1, act="relu")
    # residual add + ReLU fused into the c3 matmul epilogue
    out = conv_bn(out, bp["c3"], stride=1, pad=0, act="relu", residual=identity)
    return out


# --------------------------------------------------------------------------- parameters
def _dense_init(key, fan_in, fan_out):
    kw, kb = jax.random.split(key)
    w = jax.random.normal(kw, (fan_in, fan_out), jnp.float32) / math.sqrt(fan_in)
    b = 0.01 * jax.random.normal(kb, (fan_out,), jnp.float32)
    return w, b


def _conv_bn_init(key, kh, kw, cin, cout):
    k1, k2, k3 = jax.random.split(key, 3)
    w = jax.random.normal(k1, (kh * kw * cin, cout), jnp.float32) / math.sqrt(kh * kw * cin)
    gamma = 1.0 + 0.1 * jax.random.normal(k2, (cout,), jnp.float32)
    beta = 0.1 * jax.random.normal(k3, (cout,), jnp.float32)
    # BN eval mode with running_mean=0, running_var=1, eps=1e-5 -> fold scale into W.
    scale = gamma / jnp.sqrt(1.0 + 1e-5)
    return {"dense": make_dense(w * scale[None, :], beta), "kh": kh, "kw": kw}


def make_resnet_params(key, base=8):
    keys = iter(jax.random.split(key, 128))
    p = {"stem": _conv_bn_init(next(keys), 7, 7, 3, base)}
    cfg = [(3, base, 1), (4, base * 2, 2), (6, base * 4, 2), (3, base * 8, 2)]  # ResNet50
    in_ch = base
    layers = []
    for n_blocks, width, stride in cfg:
        blocks = []
        for bi in range(n_blocks):
            s = stride if bi == 0 else 1
            bp = {
                "c1": _conv_bn_init(next(keys), 1, 1, in_ch, width),
                "c2": _conv_bn_init(next(keys), 3, 3, width, width),
                "c3": _conv_bn_init(next(keys), 1, 1, width, width * 4),
                "stride": s,
            }
            if s != 1 or in_ch != width * 4:
                bp["down"] = _conv_bn_init(next(keys), 1, 1, in_ch, width * 4)
            in_ch = width * 4
            blocks.append(bp)
        layers.append(blocks)
    p["layers"] = layers
    p["out_ch"] = in_ch
    return p


def make_text_params(key, vocab, max_pos, hidden, n_layers, ffn_dim, embed_dim, n_heads):
    keys = jax.random.split(key, 3 + n_layers)
    p = {
        "hidden": hidden,
        "word_emb": 0.02 * jax.random.normal(keys[0], (vocab, hidden), jnp.float32),
        "pos_emb": 0.02 * jax.random.normal(keys[1], (max_pos, hidden), jnp.float32),
        "emb_ln_g": jnp.ones((hidden,), jnp.float32),
        "emb_ln_b": jnp.zeros((hidden,), jnp.float32),
    }
    inv_sqrt_dh = 1.0 / math.sqrt(hidden // n_heads)
    layers = []
    for i in range(n_layers):
        lk = jax.random.split(keys[2 + i], 6)
        wq, bq = _dense_init(lk[0], hidden, hidden)
        wk, bk = _dense_init(lk[1], hidden, hidden)
        wv, bv = _dense_init(lk[2], hidden, hidden)
        wq, bq = wq * inv_sqrt_dh, bq * inv_sqrt_dh      # fold 1/sqrt(Dh) into Q
        layer = {"qkv": make_dense(jnp.concatenate([wq, wk, wv], axis=1),
                                   jnp.concatenate([bq, bk, bv], axis=0))}
        wo, bo = _dense_init(lk[3], hidden, hidden)
        layer["o"] = make_dense(wo, bo)
        layer["ln1_g"] = jnp.ones((hidden,), jnp.float32)
        layer["ln1_b"] = jnp.zeros((hidden,), jnp.float32)
        w1, b1 = _dense_init(lk[4], hidden, ffn_dim)
        w2, b2 = _dense_init(lk[5], ffn_dim, hidden)
        layer["ffn1"] = make_dense(w1, b1)
        layer["ffn2"] = make_dense(w2, b2)
        layer["ln2_g"] = jnp.ones((hidden,), jnp.float32)
        layer["ln2_b"] = jnp.zeros((hidden,), jnp.float32)
        layers.append(layer)
    p["layers"] = layers
    wp, bp = _dense_init(keys[2 + n_layers], hidden, embed_dim)
    p["proj"] = make_dense(wp, bp)
    return p


def make_image_params(key, base, fc1_dim, embed_dim):
    k1, k2, k3 = jax.random.split(key, 3)
    p = {"backbone": make_resnet_params(k1, base)}
    out_ch = p["backbone"]["out_ch"]
    w1, b1 = _dense_init(k2, out_ch, fc1_dim)
    p["fc1"] = make_dense(w1, b1)
    w2, b2 = _dense_init(k3, fc1_dim, embed_dim)
    p["proj"] = make_dense(w2, b2)
    return p


# ------------------------------------------------------------------------ forward passes
def text_encoder_forward(p, input_ids, attention_mask, n_heads):
    B, L = input_ids.shape
    H = p["hidden"]
    # TODO(synk): embedding lookup is an XLA gather (jnp.take), not a Pallas kernel.
    x = jnp.take(p["word_emb"], input_ids, axis=0) + p["pos_emb"][:L][None, :, :]
    x2 = layernorm(x.reshape(B * L, H), p["emb_ln_g"], p["emb_ln_b"], eps=1e-12)

    mask_add = (1.0 - attention_mask.astype(jnp.float32)) * (-1e9)   # (B, L) key mask

    for layer in p["layers"]:
        qkv = matmul_fused(x2, layer["qkv"])                    # fused Q|K|V (B*L, 3H)
        ctx = flash_attention(qkv.reshape(B, L, 3 * H), mask_add, n_heads, H)
        attn_out = matmul_fused(ctx, layer["o"])
        x2 = layernorm(attn_out, layer["ln1_g"], layer["ln1_b"], residual=x2, eps=1e-12)
        h = matmul_fused(x2, layer["ffn1"], act="gelu")
        ffn_out = matmul_fused(h, layer["ffn2"])
        x2 = layernorm(ffn_out, layer["ln2_g"], layer["ln2_b"], residual=x2, eps=1e-12)

    pooled = x2.reshape(B, L, H)[:, 0]                 # last_hidden_state[:, 0] (CLS)
    # text_projection with the final L2-normalize fused into the matmul epilogue
    return matmul_fused(pooled, p["proj"], l2norm=True, out_dtype=jnp.float32)


def image_encoder_forward(p, images_nchw):
    x = jnp.transpose(images_nchw, (0, 2, 3, 1)).astype(jnp.bfloat16)   # NCHW -> NHWC
    bb = p["backbone"]
    x = conv_bn(x, bb["stem"], stride=2, pad=3, act="relu")
    x = maxpool_3x3_s2(x)
    for blocks in bb["layers"]:
        for bp in blocks:
            x = bottleneck(x, bp)
    feat = global_avg_pool(x)                          # adaptive avgpool(1,1) + .squeeze()
    h = matmul_fused(feat, p["fc1"], act="relu")       # relu(fc1(x))
    # img_projection with the final L2-normalize fused into the matmul epilogue
    return matmul_fused(h, p["proj"], l2norm=True, out_dtype=jnp.float32)


def clip_forward(params, input_ids, attention_mask, images):
    text_emb = text_encoder_forward(params["text"], input_ids, attention_mask,
                                    params["n_heads"])
    img_emb = image_encoder_forward(params["image"], images)
    return text_emb, img_emb


# --------------------------------------------------------------------------------- main
if __name__ == "__main__":
    # scaled-down config (real: hidden=768, 6 layers, 12 heads, resnet base=64, embed=256)
    VOCAB, MAX_POS, HIDDEN, N_LAYERS, N_HEADS, FFN = 100, 16, 32, 6, 4, 64
    BASE, FC1, EMBED_DIM = 8, 64, 32
    B, L = 2, 8

    root = jax.random.PRNGKey(0)
    k_txt, k_img, k_ids, k_px = jax.random.split(root, 4)
    params = {
        "text": make_text_params(k_txt, VOCAB, MAX_POS, HIDDEN, N_LAYERS, FFN,
                                 EMBED_DIM, N_HEADS),
        "image": make_image_params(k_img, BASE, FC1, EMBED_DIM),
        "n_heads": N_HEADS,
    }

    input_ids = jax.random.randint(k_ids, (B, L), 0, VOCAB, dtype=jnp.int32)
    attention_mask = jnp.array([[1, 1, 1, 1, 1, 1, 1, 1],
                                [1, 1, 1, 1, 1, 1, 0, 0]], dtype=jnp.int32)
    images = jax.random.normal(k_px, (B, 3, 32, 32), jnp.float32)   # NCHW like PyTorch

    text_embeddings, image_embeddings = clip_forward(params, input_ids, attention_mask, images)
    jax.block_until_ready((text_embeddings, image_embeddings))

    assert text_embeddings.shape == (B, EMBED_DIM)
    assert image_embeddings.shape == (B, EMBED_DIM)
    assert bool(jnp.all(jnp.isfinite(text_embeddings))) and bool(jnp.all(jnp.isfinite(image_embeddings)))
    # both outputs are L2-normalized
    assert bool(jnp.allclose(jnp.linalg.norm(text_embeddings, axis=-1), 1.0, atol=1e-4))
    assert bool(jnp.allclose(jnp.linalg.norm(image_embeddings, axis=-1), 1.0, atol=1e-4))
    print("KERNEL_OK")
</pallas_src>

<mosaic_0001>
module attributes {stable_mosaic.version = 11 : i64} {
  func.func @_ln_kernel(%arg0: i32, %arg1: memref<16x32xf32, #tpu.memory_space<vmem>>, %arg2: memref<1x32xf32, #tpu.memory_space<vmem>>, %arg3: memref<1x32xf32, #tpu.memory_space<vmem>>, %arg4: memref<16x32xbf16, #tpu.memory_space<vmem>>) attributes {dimension_semantics = [#tpu.dimension_semantics<parallel>], iteration_bounds = array<i64: 1>, scalar_prefetch = 0 : i64, scratch_operands = 0 : i64, tpu.core_type = #tpu.core_type<tc>, window_params = [{transform_indices = @transform_0, window_bounds = array<i64: 16, 32>}, {pipeline_mode = #tpu.pipeline_mode<synchronous>, transform_indices = @transform_1, window_bounds = array<i64: 1, 32>}, {pipeline_mode = #tpu.pipeline_mode<synchronous>, transform_indices = @transform_2, window_bounds = array<i64: 1, 32>}, {transform_indices = @transform_3, window_bounds = array<i64: 16, 32>}]} {
    %c0 = arith.constant 0 : index
    %c0_0 = arith.constant 0 : index
    %0 = vector.load %arg1[%c0, %c0_0] : memref<16x32xf32, #tpu.memory_space<vmem>>, vector<16x32xf32>
    %cst = arith.constant dense<0.000000e+00> : vector<16xf32>
    %1 = vector.multi_reduction <add>, %0, %cst [1] : vector<16x32xf32> to vector<16xf32>
    %2 = vector.shape_cast %1 : vector<16xf32> to vector<16x1xf32>
    %cst_1 = arith.constant 3.200000e+01 : f32
    %3 = vector.broadcast %cst_1 : f32 to vector<16x1xf32>
    %4 = arith.divf %2, %3 : vector<16x1xf32>
    %5 = vector.broadcast %4 : vector<16x1xf32> to vector<16x32xf32>
    %6 = arith.subf %0, %5 : vector<16x32xf32>
    %7 = arith.mulf %6, %6 : vector<16x32xf32>
    %cst_2 = arith.constant dense<0.000000e+00> : vector<16xf32>
    %8 = vector.multi_reduction <add>, %7, %cst_2 [1] : vector<16x32xf32> to vector<16xf32>
    %9 = vector.shape_cast %8 : vector<16xf32> to vector<16x1xf32>
    %cst_3 = arith.constant 3.200000e+01 : f32
    %10 = vector.broadcast %cst_3 : f32 to vector<16x1xf32>
    %11 = arith.divf %9, %10 : vector<16x1xf32>
    %cst_4 = arith.constant 9.99999996E-13 : f32
    %12 = vector.broadcast %cst_4 : f32 to vector<16x1xf32>
    %13 = arith.addf %11, %12 : vector<16x1xf32>
    %14 = math.rsqrt %13 : vector<16x1xf32>
    %15 = vector.broadcast %14 : vector<16x1xf32> to vector<16x32xf32>
    %16 = arith.mulf %6, %15 : vector<16x32xf32>
    %c0_5 = arith.constant 0 : index
    %c0_6 = arith.constant 0 : index
    %17 = vector.load %arg2[%c0_5, %c0_6] : memref<1x32xf32, #tpu.memory_space<vmem>>, vector<1x32xf32>
    %18 = vector.broadcast %17 : vector<1x32xf32> to vector<16x32xf32>
    %19 = arith.mulf %16, %18 : vector<16x32xf32>
    %c0_7 = arith.constant 0 : index
    %c0_8 = arith.constant 0 : index
    %20 = vector.load %arg3[%c0_7, %c0_8] : memref<1x32xf32, #tpu.memory_space<vmem>>, vector<1x32xf32>
    %21 = vector.broadcast %20 : vector<1x32xf32> to vector<16x32xf32>
    %22 = arith.addf %19, %21 : vector<16x32xf32>
    %23 = arith.truncf %22 : vector<16x32xf32> to vector<16x32xbf16>
    %c0_9 = arith.constant 0 : index
    %c0_10 = arith.constant 0 : index
    %24 = vector.load %arg4[%c0_9, %c0_10] : memref<16x32xbf16, #tpu.memory_space<vmem>>, vector<16x32xbf16>
    tpu.vector_store %arg4[%c0_9, %c0_10], %23 {strides = array<i32>} : memref<16x32xbf16, #tpu.memory_space<vmem>>, vector<16x32xbf16>,
    return
  }
  func.func @transform_0(%arg0: i32) -> (i32, i32) {
    %c0_i32 = arith.constant 0 : i32
    %c0_i32_0 = arith.constant 0 : i32
    return %arg0, %c0_i32 : i32, i32
  }
  func.func @transform_1(%arg0: i32) -> (i32, i32) {
    %c0_i32 = arith.constant 0 : i32
    %c0_i32_0 = arith.constant 0 : i32
    %c0_i32_1 = arith.constant 0 : i32
    return %c0_i32, %c0_i32_0 : i32, i32
  }
  func.func @transform_2(%arg0: i32) -> (i32, i32) {
    %c0_i32 = arith.constant 0 : i32
    %c0_i32_0 = arith.constant 0 : i32
    %c0_i32_1 = arith.constant 0 : i32
    return %c0_i32, %c0_i32_0 : i32, i32
  }
  func.func @transform_3(%arg0: i32) -> (i32, i32) {
    %c0_i32 = arith.constant 0 : i32
    %c0_i32_0 = arith.constant 0 : i32
    return %arg0, %c0_i32 : i32, i32
  }
}

</mosaic_0001>

<llo_original>
// kernel: tpu_custom_call.1
$region0: #{tpu_custom_call.1}
  #allocation0 [shape = 'u32[]', space=smem, size = 0x4, offset = 0x4, fixed_abs, tag = 'smem constant byte address 0x4 - core index']
  #allocation1 [shape = 'u32[144,128]{1,0:T(1,128)}', space=vmem, size = 0x12000, scoped, tag = 'internal scratch']
  %s0 = inlined_call_operand.hbm [shape: f32[16,32], index: 0, kind: input, shape index: {}]
  %s1 = inlined_call_operand.vmem [shape: f32[1,32], index: 1, kind: input, shape index: {}]
  %s2 = inlined_call_operand.vmem [shape: f32[1,32], index: 2, kind: input, shape index: {}]
  %s3 = inlined_call_operand.hbm [shape: bf16[16,32], index: 3, kind: output, shape index: {}]
  %s4 = sld [smem:[#allocation0]]
  $region26: #{tpu_custom_call.1} parent=0
    _
  %s6 = ssub.s32 1, %s4
  %s7 = scalar_select 0, %s6, %s4
  $region1: #{tpu_custom_call.1} parent=0
    #allocation2 [shape = 'u8[8192]{0}', space=vmem, size = 0x2000, scoped, tag = 'input window, operand 0, single buffered']
    #allocation3 [shape = 's32[1]{0}', space=sflag, size = 0x4, scoped, tag = 'scoped memory for tpu_custom_call.1']
    #allocation4 [shape = 's32[1]{0}', space=sflag, size = 0x4, scoped, tag = 'scoped memory for tpu_custom_call.1']
    #allocation5 [shape = 'u8[4096]{0}', space=vmem, size = 0x1000, scoped, tag = 'output window, operand 0, single buffered']
    %8 = vsyncpa [#allocation3], 0
    %9 = vsyncpa [#allocation4], 0
    // Predicated region
    $region2: #{tpu_custom_call.1} parent=1 // pred_check
      _
    $region3: #{tpu_custom_call.1} parent=1 // pred_check_branch
      %11 = sbr.rel (0) target = $region5
    $region4: #{tpu_custom_call.1} parent=1 // pred_region
      %s13 = ssub.s32 256, 256
      %14 = vsyncadd [#allocation3], %s13
      %s15 = sshll.u32 [#allocation2], 4
      %s16 = int_to_ptr.vmem [resolvable:$true] %s15
      %21 = dma.hbm_to_vmem [thread:$0]  %s0, 256, %s16, [#allocation3], 128, 128, 8
    $region5: #{tpu_custom_call.1} parent=1 // pred_fallthru
      _
    // Predicated region
    $region6: #{tpu_custom_call.1} parent=1 // pred_check
      _
    $region7: #{tpu_custom_call.1} parent=1 // pred_check_branch
      %23 = sbr.rel (0) target = $region9
    $region8: #{tpu_custom_call.1} parent=1 // pred_region
      _
    $region9: #{tpu_custom_call.1} parent=1 // pred_fallthru
      _
    // Predicated region
    $region10: #{tpu_custom_call.1} parent=1 // pred_check
      _
    $region11: #{tpu_custom_call.1} parent=1 // pred_check_branch
      %25 = sbr.rel (0) target = $region13
    $region12: #{tpu_custom_call.1} parent=1 // pred_region
      _
    $region13: #{tpu_custom_call.1} parent=1 // pred_fallthru
      _
    // Predicated region
    $region14: #{tpu_custom_call.1} parent=1 // pred_check
      _
    $region15: #{tpu_custom_call.1} parent=1 // pred_check_branch
      %27 = sbr.rel (0) target = $region17
    $region16: #{tpu_custom_call.1} parent=1 // pred_region
      %28 = dma.done [#allocation3], 256
    $region17: #{tpu_custom_call.1} parent=1 // pred_fallthru
      _
    %v29 = vld [vmem:[#allocation2] sm:$0xff]
    %v30 = vld [vmem:[#allocation2 + $0x8] sm:$0xff]
    %vm31 = vcmask 261120
    %v32 = vsel %vm31, %v29, 0.0
    %33 = vadd.xlane.f32.xlu0 %v32
    %v34 = vpop.xlane.xlu0 %33
    %v35 = vsel %vm31, %v30, 0.0
    %36 = vadd.xlane.f32.xlu0 %v35
    %v37 = vpop.xlane.xlu0 %36
    %v38 = vrcp.pop 32.0
    %v39 = vmul.f32 %v34, %v38
    %v40 = vmul.f32 %v37, %v38
    %v41 = vsub.f32 %v29, %v39
    %v42 = vsub.f32 %v30, %v40
    %v43 = vmul.f32 %v41, %v41
    %v44 = vmul.f32 %v42, %v42
    %v45 = vsel %vm31, %v43, 0.0
    %46 = vadd.xlane.f32.xlu0 %v45
    %v47 = vpop.xlane.xlu0 %46
    %v48 = vsel %vm31, %v44, 0.0
    %49 = vadd.xlane.f32.xlu0 %v48
    %v50 = vpop.xlane.xlu0 %49
    %v51 = vmul.f32 %v47, %v38
    %v52 = vmul.f32 %v50, %v38
    %v53 = vadd.f32 %v51, 1e-12
    %v54 = vadd.f32 %v52, 1e-12
    %v55 = vrsqrt.pop %v53
    %v56 = vrsqrt.pop %v54
    %v57 = vmul.f32 %v41, %v55
    %v58 = vmul.f32 %v42, %v56
    %v59 = vld [vmem:[%s1] sm:$0x1]
    %v61 = vlaneseq
    %v62 = vshrl.u32 %v61, 7
    %v63 = vsub.s32 0, %v62
    %v64 = vrot.slane %v59, %v63
    %v66 = vmul.f32 %v57, %v64
    %v67 = vmul.f32 %v58, %v64
    %v68 = vld [vmem:[%s2] sm:$0x1]
    %v70 = vlaneseq
    %v71 = vshrl.u32 %v70, 7
    %v72 = vsub.s32 0, %v71
    %v73 = vrot.slane %v68, %v72
    %v75 = vadd.f32 %v66, %v73
    %v76 = vadd.f32 %v67, %v73
    %v77 = vpack.c.bf16 %v76, %v75
    %v79 = vunpack.c.l.b16 %v77
    %v80 = vunpack.c.h.b16 %v77
    %v81 = vpack.c.b16 %v79, %v79
    %v82 = vpack.c.b16 %v80, %v80
    %vm85 = vcmask 257024
    %86 = vst.msk [vmem:[#allocation5] sm:$0xf] %vm85, %v81
    %87 = vst.msk [vmem:[#allocation5 + $0x4] sm:$0xf] %vm85, %v82
    // Predicated region
    $region18: #{tpu_custom_call.1} parent=1 // pred_check
      _
    $region19: #{tpu_custom_call.1} parent=1 // pred_check_branch
      %89 = sbr.rel (0) target = $region21
    $region20: #{tpu_custom_call.1} parent=1 // pred_region
      %s91 = ssub.s32 128, 128
      %92 = vsyncadd [#allocation4], %s91
      %s93 = sshll.u32 [#allocation5], 4
      %s94 = int_to_ptr.vmem [resolvable:$true] %s93
      %99 = dma.vmem_to_hbm [thread:$0]  %s94, 128, %s3, [#allocation4], 64, 64, 4
    $region21: #{tpu_custom_call.1} parent=1 // pred_fallthru
      _
    // Predicated region
    $region22: #{tpu_custom_call.1} parent=1 // pred_check
      _
    $region23: #{tpu_custom_call.1} parent=1 // pred_check_branch
      %101 = sbr.rel (0) target = $region25
    $region24: #{tpu_custom_call.1} parent=1 // pred_region
      %102 = dma.done [#allocation4], 128
    $region25: #{tpu_custom_call.1} parent=1 // pred_fallthru
      _
    %103 = vsyncpa [#allocation3], 1
    %104 = vsyncpa [#allocation4], 1

</llo_original>
